<compile_context>
chip_gen: v5e
topology: v5e:2x2
jax: 0.10.0
libtpu: 0.0.40
codegen_flags: <defaults>
</compile_context>

<pallas_src>
import jax
import jax.numpy as jnp
from jax.experimental import pallas as pl
from jax.experimental.pallas import tpu as pltpu

IN_F, H, OUT_F = 4, 32, 2
LANES = 128          # lane width; all padded blocks are 128 wide
BATCH_TILE = 512     # batch rows per grid step once the batch is large

# f32 slab (8, 128):  rows 0:4 = W1 (cols 0:32), row 4 = b1, row 5 = b2, row 6 = b3
# bf16 slab (256,128): rows 0:128 = W2 zero-padded, rows 128:256 = W3 zero-padded
F32_ROWS = 8
BF16_ROWS = 2 * LANES


def mlp_kernel(x_ref, p32_ref, p16_ref, o_ref):
    x = x_ref[...]                                   # (TB, 4) f32

    w1 = p32_ref[0:IN_F, :]                          # (4, 128) f32 (cols 32: are 0)
    b1 = p32_ref[4:5, :]                             # (1, 128) f32
    b2 = p32_ref[5:6, :]
    b3 = p32_ref[6:7, :]
    w2 = p16_ref[0:LANES, :]                         # (128, 128) bf16 (zero padded)
    w3 = p16_ref[LANES:2 * LANES, :]                 # (128, 128) bf16 (zero padded)

    # Layer 1: K=4, kept in f32 (tiny; elementwise stays f32 for v5e).
    h = jnp.dot(x, w1, preferred_element_type=jnp.float32) + b1
    h = jnp.maximum(h, 0.0)                          # (TB, 128); cols 32: are exactly 0

    # Layers 2/3: bf16 operands, f32 accumulation (single-pass MXU on v6e/v7x).
    h = jnp.dot(h.astype(jnp.bfloat16), w2, preferred_element_type=jnp.float32) + b2
    h = jnp.maximum(h, 0.0)

    # Lane-dense (TB, 128) store; only cols 0:2 are meaningful, rest are 0.
    o_ref[...] = jnp.dot(h.astype(jnp.bfloat16), w3,
                         preferred_element_type=jnp.float32) + b3


def init_params(key):
    """PyTorch nn.Linear default init: U(-1/sqrt(fan_in), 1/sqrt(fan_in)).
    Weights stored as (in, out) so y = x @ W + b (== PyTorch x @ W.T)."""
    dims = [(IN_F, H), (H, H), (H, OUT_F)]
    params = []
    for fan_in, fan_out in dims:
        key, kw, kb = jax.random.split(key, 3)
        bound = fan_in ** -0.5
        params.append(jax.random.uniform(kw, (fan_in, fan_out), jnp.float32, -bound, bound))
        params.append(jax.random.uniform(kb, (fan_out,), jnp.float32, -bound, bound))
    return tuple(params)


def pack_params(params):
    """One-time packing/padding (NOT per call): 2 lane/sublane-aligned slabs."""
    w1, b1, w2, b2, w3, b3 = params
    p32 = jnp.zeros((F32_ROWS, LANES), jnp.float32)
    p32 = p32.at[0:IN_F, 0:H].set(w1)
    p32 = p32.at[4, 0:H].set(b1)
    p32 = p32.at[5, 0:H].set(b2)
    p32 = p32.at[6, 0:OUT_F].set(b3)
    p16 = jnp.zeros((BF16_ROWS, LANES), jnp.float32)
    p16 = p16.at[0:H, 0:H].set(w2)
    p16 = p16.at[LANES:LANES + H, 0:OUT_F].set(w3)
    return p32, p16.astype(jnp.bfloat16)


@jax.jit
def nn_v2_forward(x, packed):
    p32, p16 = packed
    B = x.shape[0]

    # Pick a batch tile (multiple of 8 sublanes); grid over batch for big rollouts.
    if B <= BATCH_TILE:
        tile = max(8, -(-B // 8) * 8)
        bp = tile
    else:
        tile = BATCH_TILE
        bp = -(-B // BATCH_TILE) * BATCH_TILE
    if bp != B:
        x = jnp.pad(x, ((0, bp - B), (0, 0)))
    n_tiles = bp // tile

    out = pl.pallas_call(
        mlp_kernel,
        out_shape=jax.ShapeDtypeStruct((bp, LANES), jnp.float32),
        grid=(n_tiles,),
        in_specs=[
            pl.BlockSpec((tile, IN_F), lambda i: (i, 0)),          # x batch tile
            pl.BlockSpec((F32_ROWS, LANES), lambda i: (0, 0)),     # W1 + biases (resident)
            pl.BlockSpec((BF16_ROWS, LANES), lambda i: (0, 0)),    # W2/W3 slab (resident)
        ],
        out_specs=pl.BlockSpec((tile, LANES), lambda i: (i, 0)),
        compiler_params=pltpu.CompilerParams(
            dimension_semantics=("parallel",)),                    # v7x: 2 TCs split batch
    )(x, p32, p16)
    return out[:B, :OUT_F]


if __name__ == "__main__":
    key = jax.random.PRNGKey(0)
    key, kx = jax.random.split(key)
    B = 8
    x = jax.random.normal(kx, (B, IN_F), jnp.float32)   # cartpole observation: 4 features

    params = init_params(key)
    packed = pack_params(params)                          # one-time, off the per-call path
    packed = jax.tree_util.tree_map(jax.block_until_ready, packed)

    y = nn_v2_forward(x, packed)
    jax.block_until_ready(y)
    assert y.shape == (B, OUT_F)

    w1, b1, w2, b2, w3, b3 = params
    bf = jnp.bfloat16

    # Reference A: same math as the kernel (layer 1 f32, layers 2/3 bf16 operands, f32 accum).
    h = jnp.maximum(x @ w1 + b1, 0.0)
    h = jnp.maximum(jnp.dot(h.astype(bf), w2.astype(bf),
                            preferred_element_type=jnp.float32) + b2, 0.0)
    ref_a = jnp.dot(h.astype(bf), w3.astype(bf),
                    preferred_element_type=jnp.float32) + b3
    assert jnp.allclose(y, ref_a, atol=5e-3, rtol=5e-3)

    # Reference B: exact f32 PyTorch semantics (looser tol covers bf16 operand rounding).
    h = jnp.maximum(x @ w1 + b1, 0.0)
    h = jnp.maximum(h @ w2 + b2, 0.0)
    ref_b = h @ w3 + b3
    assert jnp.allclose(y, ref_b, atol=5e-2, rtol=5e-2)

    print("KERNEL_OK")
</pallas_src>

<mosaic_0001>
module attributes {stable_mosaic.version = 11 : i64} {
  func.func @mlp_kernel(%arg0: i32, %arg1: memref<8x4xf32, #tpu.memory_space<vmem>>, %arg2: memref<8x128xf32, #tpu.memory_space<vmem>>, %arg3: memref<256x128xbf16, #tpu.memory_space<vmem>>, %arg4: memref<8x128xf32, #tpu.memory_space<vmem>>) attributes {dimension_semantics = [#tpu.dimension_semantics<parallel>], iteration_bounds = array<i64: 1>, scalar_prefetch = 0 : i64, scratch_operands = 0 : i64, tpu.core_type = #tpu.core_type<tc>, window_params = [{transform_indices = @transform_0, window_bounds = array<i64: 8, 4>}, {pipeline_mode = #tpu.pipeline_mode<synchronous>, transform_indices = @transform_1, window_bounds = array<i64: 8, 128>}, {pipeline_mode = #tpu.pipeline_mode<synchronous>, transform_indices = @transform_2, window_bounds = array<i64: 256, 128>}, {transform_indices = @transform_3, window_bounds = array<i64: 8, 128>}]} {
    %c0 = arith.constant 0 : index
    %c0_0 = arith.constant 0 : index
    %0 = vector.load %arg1[%c0, %c0_0] : memref<8x4xf32, #tpu.memory_space<vmem>>, vector<8x4xf32>
    %c0_1 = arith.constant 0 : index
    %c0_2 = arith.constant 0 : index
    %1 = vector.load %arg2[%c0_1, %c0_2] : memref<8x128xf32, #tpu.memory_space<vmem>>, vector<4x128xf32>
    %c4 = arith.constant 4 : index
    %c0_3 = arith.constant 0 : index
    %2 = vector.load %arg2[%c4, %c0_3] : memref<8x128xf32, #tpu.memory_space<vmem>>, vector<1x128xf32>
    %c5 = arith.constant 5 : index
    %c0_4 = arith.constant 0 : index
    %3 = vector.load %arg2[%c5, %c0_4] : memref<8x128xf32, #tpu.memory_space<vmem>>, vector<1x128xf32>
    %c6 = arith.constant 6 : index
    %c0_5 = arith.constant 0 : index
    %4 = vector.load %arg2[%c6, %c0_5] : memref<8x128xf32, #tpu.memory_space<vmem>>, vector<1x128xf32>
    %c0_6 = arith.constant 0 : index
    %c0_7 = arith.constant 0 : index
    %5 = vector.load %arg3[%c0_6, %c0_7] : memref<256x128xbf16, #tpu.memory_space<vmem>>, vector<128x128xbf16>
    %c128 = arith.constant 128 : index
    %c0_8 = arith.constant 0 : index
    %6 = vector.load %arg3[%c128, %c0_8] : memref<256x128xbf16, #tpu.memory_space<vmem>>, vector<128x128xbf16>
    %cst = arith.constant dense<0.000000e+00> : vector<8x128xf32>
    %7 = tpu.matmul %0, %1, %cst {dimension_numbers = #tpu.dot_dimension_numbers<[1], [0], [0], [1], [0, 0, 1, 1], [], []>} : vector<8x4xf32>, vector<4x128xf32>, vector<8x128xf32> -> vector<8x128xf32>
    %8 = vector.broadcast %2 : vector<1x128xf32> to vector<8x128xf32>
    %9 = arith.addf %7, %8 : vector<8x128xf32>
    %cst_9 = arith.constant 0.000000e+00 : f32
    %10 = vector.broadcast %cst_9 : f32 to vector<8x128xf32>
    %11 = arith.maximumf %9, %10 : vector<8x128xf32>
    %12 = arith.truncf %11 : vector<8x128xf32> to vector<8x128xbf16>
    %cst_10 = arith.constant dense<0.000000e+00> : vector<8x128xf32>
    %13 = tpu.matmul %12, %5, %cst_10 {dimension_numbers = #tpu.dot_dimension_numbers<[1], [0], [0], [1], [0, 0, 1, 1], [], []>} : vector<8x128xbf16>, vector<128x128xbf16>, vector<8x128xf32> -> vector<8x128xf32>
    %14 = vector.broadcast %3 : vector<1x128xf32> to vector<8x128xf32>
    %15 = arith.addf %13, %14 : vector<8x128xf32>
    %cst_11 = arith.constant 0.000000e+00 : f32
    %16 = vector.broadcast %cst_11 : f32 to vector<8x128xf32>
    %17 = arith.maximumf %15, %16 : vector<8x128xf32>
    %18 = arith.truncf %17 : vector<8x128xf32> to vector<8x128xbf16>
    %cst_12 = arith.constant dense<0.000000e+00> : vector<8x128xf32>
    %19 = tpu.matmul %18, %6, %cst_12 {dimension_numbers = #tpu.dot_dimension_numbers<[1], [0], [0], [1], [0, 0, 1, 1], [], []>} : vector<8x128xbf16>, vector<128x128xbf16>, vector<8x128xf32> -> vector<8x128xf32>
    %20 = vector.broadcast %4 : vector<1x128xf32> to vector<8x128xf32>
    %21 = arith.addf %19, %20 : vector<8x128xf32>
    %c0_13 = arith.constant 0 : index
    %c0_14 = arith.constant 0 : index
    %22 = vector.load %arg4[%c0_13, %c0_14] : memref<8x128xf32, #tpu.memory_space<vmem>>, vector<8x128xf32>
    tpu.vector_store %arg4[%c0_13, %c0_14], %21 {strides = array<i32>} : memref<8x128xf32, #tpu.memory_space<vmem>>, vector<8x128xf32>,
    return
  }
  func.func @transform_0(%arg0: i32) -> (i32, i32) {
    %c0_i32 = arith.constant 0 : i32
    %c0_i32_0 = arith.constant 0 : i32
    return %arg0, %c0_i32 : i32, i32
  }
  func.func @transform_1(%arg0: i32) -> (i32, i32) {
    %c0_i32 = arith.constant 0 : i32
    %c0_i32_0 = arith.constant 0 : i32
    %c0_i32_1 = arith.constant 0 : i32
    return %c0_i32, %c0_i32_0 : i32, i32
  }
  func.func @transform_2(%arg0: i32) -> (i32, i32) {
    %c0_i32 = arith.constant 0 : i32
    %c0_i32_0 = arith.constant 0 : i32
    %c0_i32_1 = arith.constant 0 : i32
    return %c0_i32, %c0_i32_0 : i32, i32
  }
  func.func @transform_3(%arg0: i32) -> (i32, i32) {
    %c0_i32 = arith.constant 0 : i32
    %c0_i32_0 = arith.constant 0 : i32
    return %arg0, %c0_i32 : i32, i32
  }
}

</mosaic_0001>

<llo_original>
// kernel: nn_v2_forward.1
$region0: #{nn_v2_forward.1}
  #allocation0 [shape = 'u32[]', space=smem, size = 0x4, offset = 0x4, fixed_abs, tag = 'smem constant byte address 0x4 - core index']
  #allocation1 [shape = 'u32[72,128]{1,0:T(1,128)}', space=vmem, size = 0x9000, scoped, tag = 'internal scratch']
  %s0 = inlined_call_operand.vmem [shape: f32[8,4], index: 0, kind: input, shape index: {}]
  %s1 = inlined_call_operand.vmem [shape: f32[8,128], index: 1, kind: input, shape index: {}]
  %s2 = inlined_call_operand.hbm [shape: bf16[256,128], index: 2, kind: input, shape index: {}]
  %s3 = inlined_call_operand.vmem [shape: f32[8,128], index: 3, kind: output, shape index: {}]
  %s4 = sld [smem:[#allocation0]]
  $region26: #{nn_v2_forward.1} parent=0
    _
  %s6 = ssub.s32 1, %s4
  %s7 = scalar_select 0, %s6, %s4
  $region1: #{nn_v2_forward.1} parent=0
    #allocation2 [shape = 'u8[65536]{0}', space=vmem, size = 0x10000, scoped, tag = 'input window, operand 2, single buffered']
    #allocation3 [shape = 's32[1]{0}', space=sflag, size = 0x4, scoped, tag = 'scoped memory for nn_v2_forward.1']
    %8 = vsyncpa [#allocation3], 0
    // Predicated region
    $region2: #{nn_v2_forward.1} parent=1 // pred_check
      _
    $region3: #{nn_v2_forward.1} parent=1 // pred_check_branch
      %10 = sbr.rel (0) target = $region5
    $region4: #{nn_v2_forward.1} parent=1 // pred_region
      _
    $region5: #{nn_v2_forward.1} parent=1 // pred_fallthru
      _
    // Predicated region
    $region6: #{nn_v2_forward.1} parent=1 // pred_check
      _
    $region7: #{nn_v2_forward.1} parent=1 // pred_check_branch
      %12 = sbr.rel (0) target = $region9
    $region8: #{nn_v2_forward.1} parent=1 // pred_region
      _
    $region9: #{nn_v2_forward.1} parent=1 // pred_fallthru
      _
    // Predicated region
    $region10: #{nn_v2_forward.1} parent=1 // pred_check
      _
    $region11: #{nn_v2_forward.1} parent=1 // pred_check_branch
      %14 = sbr.rel (0) target = $region13
    $region12: #{nn_v2_forward.1} parent=1 // pred_region
      %16 = vsyncadd [#allocation3], 0
      %s17 = sshll.u32 %s2, 4
      %s18 = int_to_ptr.hbm [resolvable:$true] %s17
      %s19 = sshll.u32 [#allocation2], 4
      %s20 = int_to_ptr.vmem [resolvable:$true] %s19
      %25 = dma.hbm_to_vmem [thread:$0]  %s18, 2048, %s20, [#allocation3], 64, 64, 4
    $region13: #{nn_v2_forward.1} parent=1 // pred_fallthru
      _
    // Predicated region
    $region14: #{nn_v2_forward.1} parent=1 // pred_check
      _
    $region15: #{nn_v2_forward.1} parent=1 // pred_check_branch
      %27 = sbr.rel (0) target = $region17
    $region16: #{nn_v2_forward.1} parent=1 // pred_region
      %29 = dma.done [#allocation3], 2048
    $region17: #{nn_v2_forward.1} parent=1 // pred_fallthru
      _
    %v30 = vld [vmem:[%s0] sm:$0xff]
    %v31 = vld [vmem:[%s1] sm:$0xf]
    %v32 = vld [vmem:[%s1 + $0x4] sm:$0x1]
    %v33 = vld [vmem:[%s1 + $0x5] sm:$0x1]
    %v34 = vld [vmem:[%s1 + $0x6] sm:$0x1]
    %v35 = vld [vmem:[#allocation2] sm:$0xf]
    %v36 = vld [vmem:[#allocation2 + $0x4] sm:$0xf]
    %v37 = vld [vmem:[#allocation2 + $0x8] sm:$0xf]
    %v38 = vld [vmem:[#allocation2 + $0xc] sm:$0xf]
    %v39 = vld [vmem:[#allocation2 + $0x10] sm:$0xf]
    %v40 = vld [vmem:[#allocation2 + $0x14] sm:$0xf]
    %v41 = vld [vmem:[#allocation2 + $0x18] sm:$0xf]
    %v42 = vld [vmem:[#allocation2 + $0x1c] sm:$0xf]
    %v43 = vld [vmem:[#allocation2 + $0x20] sm:$0xf]
    %v44 = vld [vmem:[#allocation2 + $0x24] sm:$0xf]
    %v45 = vld [vmem:[#allocation2 + $0x28] sm:$0xf]
    %v46 = vld [vmem:[#allocation2 + $0x2c] sm:$0xf]
    %v47 = vld [vmem:[#allocation2 + $0x30] sm:$0xf]
    %v48 = vld [vmem:[#allocation2 + $0x34] sm:$0xf]
    %v49 = vld [vmem:[#allocation2 + $0x38] sm:$0xf]
    %v50 = vld [vmem:[#allocation2 + $0x3c] sm:$0xf]
    %v51 = vld [vmem:[#allocation2 + $0x40] sm:$0xf]
    %v52 = vld [vmem:[#allocation2 + $0x44] sm:$0xf]
    %v53 = vld [vmem:[#allocation2 + $0x48] sm:$0xf]
    %v54 = vld [vmem:[#allocation2 + $0x4c] sm:$0xf]
    %v55 = vld [vmem:[#allocation2 + $0x50] sm:$0xf]
    %v56 = vld [vmem:[#allocation2 + $0x54] sm:$0xf]
    %v57 = vld [vmem:[#allocation2 + $0x58] sm:$0xf]
    %v58 = vld [vmem:[#allocation2 + $0x5c] sm:$0xf]
    %v59 = vld [vmem:[#allocation2 + $0x60] sm:$0xf]
    %v60 = vld [vmem:[#allocation2 + $0x64] sm:$0xf]
    %v61 = vld [vmem:[#allocation2 + $0x68] sm:$0xf]
    %v62 = vld [vmem:[#allocation2 + $0x6c] sm:$0xf]
    %v63 = vld [vmem:[#allocation2 + $0x70] sm:$0xf]
    %v64 = vld [vmem:[#allocation2 + $0x74] sm:$0xf]
    %v65 = vld [vmem:[#allocation2 + $0x78] sm:$0xf]
    %v66 = vld [vmem:[#allocation2 + $0x7c] sm:$0xf]
    %v67 = vperm.slane %v32, 0
    %vm68 = vcmask 31744
    %v70 = vsel %vm68, %v30, 0
    %vm72 = vcmask 1043456
    %v74 = vsel %vm72, %v31, 0
    %76 = vmatpush.msra.mxu0 0.0
    %77 = vmatpush.msra.mxu0 0.0
    %78 = vmatpush.msra.mxu0 0.0
    %79 = vmatpush.msra.mxu0 0.0
    %80 = vmatpush.msra.mxu0 0.0
    %81 = vmatpush.msra.mxu0 0.0
    %82 = vmatpush.msra.mxu0 0.0
    %83 = vmatpush.msra.mxu0 0.0
    %84 = vmatpush.msra.mxu0 0.0
    %85 = vmatpush.msra.mxu0 0.0
    %86 = vmatpush.msra.mxu0 0.0
    %87 = vmatpush.msra.mxu0 0.0
    %88 = vmatpush.msra.mxu0 0.0
    %89 = vmatpush.msra.mxu0 0.0
    %90 = vmatpush.msra.mxu0 0.0
    %91 = vmatpush.msra.mxu0 %v74
    %92 = vmatmul.f32.gmra.mxu0 %v70
    %v93 = vpop.f32.mrf.mxu0
    %v94 = vadd.f32 %v67, %v93
    %95 = vdwg.mxu0
    %v96 = vmax.f32 %v94, 0.0
    %v97 = vpack.c.bf16 %v96, %v96
    %v98 = vperm.slane %v33, 0
    %v115 = vunpack.c.l.b16 %v35
    %v116 = vunpack.c.l.b16 %v36
    %v117 = vunpack.c.l.b16 %v37
    %v118 = vunpack.c.l.b16 %v38
    %v119 = vunpack.c.l.b16 %v39
    %v120 = vunpack.c.l.b16 %v40
    %v121 = vunpack.c.l.b16 %v41
    %v122 = vunpack.c.l.b16 %v42
    %v123 = vunpack.c.l.b16 %v43
    %v124 = vunpack.c.l.b16 %v44
    %v125 = vunpack.c.l.b16 %v45
    %v126 = vunpack.c.l.b16 %v46
    %v127 = vunpack.c.l.b16 %v47
    %v128 = vunpack.c.l.b16 %v48
    %v129 = vunpack.c.l.b16 %v49
    %v130 = vunpack.c.l.b16 %v50
    %v131 = vpack.c.b16 %v116, %v115
    %v132 = vpack.c.b16 %v118, %v117
    %v133 = vpack.c.b16 %v120, %v119
    %v134 = vpack.c.b16 %v122, %v121
    %v135 = vpack.c.b16 %v124, %v123
    %v136 = vpack.c.b16 %v126, %v125
    %v137 = vpack.c.b16 %v128, %v127
    %v138 = vpack.c.b16 %v130, %v129
    %147 = vmatpush.bf16.msra.mxu0 %v138
    %148 = vmatpush.bf16.msra.mxu0 %v137
    %149 = vmatpush.bf16.msra.mxu0 %v136
    %150 = vmatpush.bf16.msra.mxu0 %v135
    %151 = vmatpush.bf16.msra.mxu0 %v134
    %152 = vmatpush.bf16.msra.mxu0 %v133
    %153 = vmatpush.bf16.msra.mxu0 %v132
    %154 = vmatpush.bf16.msra.mxu0 %v131
    %155 = vmatmul.bf16.gmra.mxu0 %v97
    %v156 = vpop.f32.mrf.mxu0
    %v157 = vadd.f32 %v98, %v156
    %v158 = vpop.f32.mrf.mxu0
    %159 = vdwg.mxu0
    %v160 = vmax.f32 %v157, 0.0
    %v161 = vpack.c.bf16 %v160, %v160
    %v162 = vperm.slane %v34, 0
    %v179 = vunpack.c.l.b16 %v51
    %v180 = vunpack.c.l.b16 %v52
    %v181 = vunpack.c.l.b16 %v53
    %v182 = vunpack.c.l.b16 %v54
    %v183 = vunpack.c.l.b16 %v55
    %v184 = vunpack.c.l.b16 %v56
    %v185 = vunpack.c.l.b16 %v57
    %v186 = vunpack.c.l.b16 %v58
    %v187 = vunpack.c.l.b16 %v59
    %v188 = vunpack.c.l.b16 %v60
    %v189 = vunpack.c.l.b16 %v61
    %v190 = vunpack.c.l.b16 %v62
    %v191 = vunpack.c.l.b16 %v63
    %v192 = vunpack.c.l.b16 %v64
    %v193 = vunpack.c.l.b16 %v65
    %v194 = vunpack.c.l.b16 %v66
    %v195 = vpack.c.b16 %v180, %v179
    %v196 = vpack.c.b16 %v182, %v181
    %v197 = vpack.c.b16 %v184, %v183
    %v198 = vpack.c.b16 %v186, %v185
    %v199 = vpack.c.b16 %v188, %v187
    %v200 = vpack.c.b16 %v190, %v189
    %v201 = vpack.c.b16 %v192, %v191
    %v202 = vpack.c.b16 %v194, %v193
    %211 = vmatpush.bf16.msra.mxu0 %v202
    %212 = vmatpush.bf16.msra.mxu0 %v201
    %213 = vmatpush.bf16.msra.mxu0 %v200
    %214 = vmatpush.bf16.msra.mxu0 %v199
    %215 = vmatpush.bf16.msra.mxu0 %v198
    %216 = vmatpush.bf16.msra.mxu0 %v197
    %217 = vmatpush.bf16.msra.mxu0 %v196
    %218 = vmatpush.bf16.msra.mxu0 %v195
    %219 = vmatmul.bf16.gmra.mxu0 %v161
    %v220 = vpop.f32.mrf.mxu0
    %v221 = vadd.f32 %v162, %v220
    %v222 = vpop.f32.mrf.mxu0
    %223 = vdwg.mxu0
    %224 = vst [vmem:[%s3] sm:$0xff] %v221
    // Predicated region
    $region18: #{nn_v2_forward.1} parent=1 // pred_check
      _
    $region19: #{nn_v2_forward.1} parent=1 // pred_check_branch
      %226 = sbr.rel (0) target = $region21
    $region20: #{nn_v2_forward.1} parent=1 // pred_region
      _
    $region21: #{nn_v2_forward.1} parent=1 // pred_fallthru
      _
    // Predicated region
    $region22: #{nn_v2_forward.1} parent=1 // pred_check
      _
    $region23: #{nn_v2_forward.1} parent=1 // pred_check_branch
      %228 = sbr.rel (0) target = $region25
    $region24: #{nn_v2_forward.1} parent=1 // pred_region
      _
    $region25: #{nn_v2_forward.1} parent=1 // pred_fallthru
      _
    %229 = vsyncpa [#allocation3], 1

</llo_original>
